<compile_context>
chip_gen: v6e
topology: v6e:2x2x1
jax: 0.10.0
libtpu: 0.0.40
codegen_flags: <defaults>
</compile_context>

<pallas_src>
import functools

import jax
import jax.numpy as jnp
from jax.experimental import pallas as pl
from jax.experimental.pallas import tpu as pltpu


def _label_smoothing_loss_kernel(pred_ref, out_ref, acc_ref, *, smoothing,
                                 classes, n_rows, tile_n, ragged):
    i = pl.program_id(0)

    @pl.when(i == 0)
    def _init():
        acc_ref[...] = jnp.zeros_like(acc_ref)

    # Hot path: per-row log-sum-exp + row sum (VPU/EUP/XLU only, no MXU).
    x = pred_ref[...].astype(jnp.float32)                         # (TN, C)
    m = jnp.max(x, axis=-1, keepdims=True)                        # (TN, 1)
    lse = jnp.log(jnp.sum(jnp.exp(x - m), axis=-1, keepdims=True)) + m
    row_sum = jnp.sum(x, axis=-1, keepdims=True)                  # (TN, 1)
    # sum_c(x - lse) = rowsum(x) - C*lse ; the -fill/N factor is folded into
    # the finalize branch so it is applied once, not per element.
    per_row = row_sum - jnp.float32(classes) * lse                # (TN, 1)

    if ragged:
        # Mask padded rows of the ragged last tile out of the partial sum.
        row_ids = i * tile_n + jax.lax.broadcasted_iota(
            jnp.int32, per_row.shape, 0)
        per_row = jnp.where(row_ids < n_rows, per_row, jnp.float32(0.0))

    acc_ref[...] += per_row

    @pl.when(i == pl.num_programs(0) - 1)
    def _finalize():
        fill = smoothing / (classes - 1)
        total = jnp.sum(acc_ref[...], keepdims=True)              # (1, 1)
        out_ref[...] = total * jnp.float32(-fill / n_rows)


def label_smoothing_loss(pred, target, *, classes, smoothing=0.0, tile_n=None):
    """Pallas equivalent of LabelSmoothingLoss(classes, smoothing)(pred, target)."""
    del target  # reference smooth_one_hot ignores label values (no scatter_)
    n, c = pred.shape
    assert c == classes

    itemsize = jnp.dtype(pred.dtype).itemsize
    if tile_n is None:
        # Largest row tile keeping one input buffer <= ~4 MiB (2x double
        # buffer fits comfortably inside default scoped VMEM on v5e/v6e/v7x).
        bytes_per_row = max(1, c * itemsize)
        tile_n = max(8, min(1024, (4 * 1024 * 1024) // bytes_per_row))

    if n <= tile_n:
        tn = n                            # full-extent block: no 8-alignment needed
    else:
        tn = max(8, (min(tile_n, n) // 8) * 8)  # second-minor dim must be 8-aligned
    grid = (pl.cdiv(n, tn),)
    ragged = (n % tn) != 0

    tile_bytes = tn * c * itemsize
    vmem_limit = int(min(48 * 1024 * 1024,
                         max(16 * 1024 * 1024, 4 * tile_bytes + (1 << 20))))

    kernel = functools.partial(
        _label_smoothing_loss_kernel,
        smoothing=float(smoothing),
        classes=int(classes),
        n_rows=int(n),
        tile_n=int(tn),
        ragged=bool(ragged),
    )
    out = pl.pallas_call(
        kernel,
        out_shape=jax.ShapeDtypeStruct((1, 1), jnp.float32),
        grid=grid,
        in_specs=[pl.BlockSpec((tn, c), lambda i: (i, 0))],
        out_specs=pl.BlockSpec((1, 1), lambda i: (0, 0)),
        scratch_shapes=[pltpu.VMEM((tn, 1), jnp.float32)],
        compiler_params=pltpu.CompilerParams(
            dimension_semantics=("arbitrary",),   # output block revisited
            vmem_limit_bytes=vmem_limit,
        ),
    )(pred)
    return out[0, 0]


def _reference(pred, classes, smoothing):
    logp = jax.nn.log_softmax(pred.astype(jnp.float32), axis=-1)
    fill = smoothing / (classes - 1)
    true_dist = jnp.full_like(logp, fill)
    return jnp.mean(jnp.sum(-true_dist * logp, axis=-1))


if __name__ == "__main__":
    key = jax.random.PRNGKey(0)
    k1, k2, k3, k4 = jax.random.split(key, 4)

    C = 32
    smoothing = 0.1

    # Case 1: multiple row tiles, N divisible by the tile size (exercises the
    # grid accumulator path, no ragged masking emitted).
    N1 = 64
    pred1 = jax.random.normal(k1, (N1, C), dtype=jnp.float32)
    target1 = jax.random.randint(k2, (N1,), 0, C, dtype=jnp.int32)
    loss1 = label_smoothing_loss(pred1, target1, classes=C,
                                 smoothing=smoothing, tile_n=16)
    loss1 = jax.block_until_ready(loss1)
    ref1 = _reference(pred1, C, smoothing)
    assert jnp.allclose(loss1, ref1, rtol=1e-5, atol=1e-5), (loss1, ref1)

    # Case 2: ragged last tile (N % tile != 0) with bf16 input streamed from
    # HBM and cast to f32 inside the kernel (exercises the row mask).
    N2 = 50
    pred2 = jax.random.normal(k3, (N2, C), dtype=jnp.float32).astype(jnp.bfloat16)
    target2 = jax.random.randint(k4, (N2,), 0, C, dtype=jnp.int32)
    loss2 = label_smoothing_loss(pred2, target2, classes=C,
                                 smoothing=smoothing, tile_n=16)
    loss2 = jax.block_until_ready(loss2)
    ref2 = _reference(pred2, C, smoothing)
    assert jnp.allclose(loss2, ref2, rtol=1e-3, atol=1e-3), (loss2, ref2)

    # Case 3: single full-extent block (no tiling path), default tile size.
    N3 = 8
    pred3 = jax.random.normal(k1, (N3, C), dtype=jnp.float32)
    target3 = jax.random.randint(k2, (N3,), 0, C, dtype=jnp.int32)
    loss3 = label_smoothing_loss(pred3, target3, classes=C, smoothing=smoothing)
    loss3 = jax.block_until_ready(loss3)
    ref3 = _reference(pred3, C, smoothing)
    assert jnp.allclose(loss3, ref3, rtol=1e-5, atol=1e-5), (loss3, ref3)

    print("KERNEL_OK")
</pallas_src>

<mosaic_0001>
module attributes {stable_mosaic.version = 11 : i64} {
  func.func @_label_smoothing_loss_kernel(%arg0: i32, %arg1: memref<16x32xf32, #tpu.memory_space<vmem>>, %arg2: memref<1x1xf32, #tpu.memory_space<vmem>>, %arg3: memref<16x1xf32, #tpu.memory_space<vmem>>) attributes {dimension_semantics = [#tpu.dimension_semantics<arbitrary>], iteration_bounds = array<i64: 4>, scalar_prefetch = 0 : i64, scratch_operands = 1 : i64, tpu.core_type = #tpu.core_type<tc>, window_params = [{transform_indices = @transform_0, window_bounds = array<i64: 16, 32>}, {pipeline_mode = #tpu.pipeline_mode<synchronous>, transform_indices = @transform_1, window_bounds = array<i64: 1, 1>}]} {
    %c0_i32 = arith.constant 0 : i32
    %0 = arith.cmpi eq, %arg0, %c0_i32 : i32
    %1 = arith.extui %0 : i1 to i32
    %c0_i32_0 = arith.constant 0 : i32
    %2 = arith.cmpi ne, %1, %c0_i32_0 : i32
    scf.if %2 {
      %cst_10 = arith.constant 0.000000e+00 : f32
      %24 = vector.broadcast %cst_10 : f32 to vector<16x1xf32>
      %c0_11 = arith.constant 0 : index
      %c0_12 = arith.constant 0 : index
      %25 = vector.load %arg3[%c0_11, %c0_12] : memref<16x1xf32, #tpu.memory_space<vmem>>, vector<16x1xf32>
      tpu.vector_store %arg3[%c0_11, %c0_12], %24 {strides = array<i32>} : memref<16x1xf32, #tpu.memory_space<vmem>>, vector<16x1xf32>,
    } else {
    }
    %c0 = arith.constant 0 : index
    %c0_1 = arith.constant 0 : index
    %3 = vector.load %arg1[%c0, %c0_1] : memref<16x32xf32, #tpu.memory_space<vmem>>, vector<16x32xf32>
    %cst = arith.constant dense<0xFF800000> : vector<16xf32>
    %4 = vector.multi_reduction <maximumf>, %3, %cst [1] : vector<16x32xf32> to vector<16xf32>
    %5 = vector.shape_cast %4 : vector<16xf32> to vector<16x1xf32>
    %6 = vector.broadcast %5 : vector<16x1xf32> to vector<16x32xf32>
    %7 = arith.subf %3, %6 : vector<16x32xf32>
    %8 = math.exp %7 : vector<16x32xf32>
    %cst_2 = arith.constant dense<0.000000e+00> : vector<16xf32>
    %9 = vector.multi_reduction <add>, %8, %cst_2 [1] : vector<16x32xf32> to vector<16xf32>
    %10 = vector.shape_cast %9 : vector<16xf32> to vector<16x1xf32>
    %11 = math.log %10 : vector<16x1xf32>
    %12 = arith.addf %11, %5 : vector<16x1xf32>
    %cst_3 = arith.constant dense<0.000000e+00> : vector<16xf32>
    %13 = vector.multi_reduction <add>, %3, %cst_3 [1] : vector<16x32xf32> to vector<16xf32>
    %14 = vector.shape_cast %13 : vector<16xf32> to vector<16x1xf32>
    %cst_4 = arith.constant 3.200000e+01 : f32
    %15 = vector.broadcast %cst_4 : f32 to vector<16x1xf32>
    %16 = arith.mulf %15, %12 : vector<16x1xf32>
    %17 = arith.subf %14, %16 : vector<16x1xf32>
    %c0_5 = arith.constant 0 : index
    %c0_6 = arith.constant 0 : index
    %18 = vector.load %arg3[%c0_5, %c0_6] : memref<16x1xf32, #tpu.memory_space<vmem>>, vector<16x1xf32>
    %19 = arith.addf %18, %17 : vector<16x1xf32>
    %c0_7 = arith.constant 0 : index
    %c0_8 = arith.constant 0 : index
    %20 = vector.load %arg3[%c0_7, %c0_8] : memref<16x1xf32, #tpu.memory_space<vmem>>, vector<16x1xf32>
    tpu.vector_store %arg3[%c0_7, %c0_8], %19 {strides = array<i32>} : memref<16x1xf32, #tpu.memory_space<vmem>>, vector<16x1xf32>,
    %c3_i32 = arith.constant 3 : i32
    %21 = arith.cmpi eq, %arg0, %c3_i32 : i32
    %22 = arith.extui %21 : i1 to i32
    %c0_i32_9 = arith.constant 0 : i32
    %23 = arith.cmpi ne, %22, %c0_i32_9 : i32
    scf.if %23 {
      %c0_10 = arith.constant 0 : index
      %c0_11 = arith.constant 0 : index
      %24 = vector.load %arg3[%c0_10, %c0_11] : memref<16x1xf32, #tpu.memory_space<vmem>>, vector<16x1xf32>
      %25 = vector.shape_cast %24 : vector<16x1xf32> to vector<1x16x1xf32>
      %cst_12 = arith.constant dense<0.000000e+00> : vector<1xf32>
      %26 = vector.multi_reduction <add>, %25, %cst_12 [1, 2] : vector<1x16x1xf32> to vector<1xf32>
      %27 = vector.shape_cast %26 : vector<1xf32> to vector<1x1x1xf32>
      %28 = vector.extract %27[0, 0, 0] : f32 from vector<1x1x1xf32>
      %29 = vector.broadcast %28 : f32 to vector<1x1xf32>
      %cst_13 = arith.constant -5.0403225E-5 : f32
      %30 = vector.broadcast %cst_13 : f32 to vector<1x1xf32>
      %31 = arith.mulf %29, %30 : vector<1x1xf32>
      %c0_14 = arith.constant 0 : index
      %c0_15 = arith.constant 0 : index
      %32 = vector.load %arg2[%c0_14, %c0_15] : memref<1x1xf32, #tpu.memory_space<vmem>>, vector<1x1xf32>
      tpu.vector_store %arg2[%c0_14, %c0_15], %31 {strides = array<i32>} : memref<1x1xf32, #tpu.memory_space<vmem>>, vector<1x1xf32>,
    } else {
    }
    return
  }
  func.func @transform_0(%arg0: i32) -> (i32, i32) {
    %c0_i32 = arith.constant 0 : i32
    %c0_i32_0 = arith.constant 0 : i32
    return %arg0, %c0_i32 : i32, i32
  }
  func.func @transform_1(%arg0: i32) -> (i32, i32) {
    %c0_i32 = arith.constant 0 : i32
    %c0_i32_0 = arith.constant 0 : i32
    %c0_i32_1 = arith.constant 0 : i32
    return %c0_i32, %c0_i32_0 : i32, i32
  }
}

</mosaic_0001>

<llo_original>
// kernel: tpu_custom_call.1
$region0: #{tpu_custom_call.1}
  #allocation0 [shape = 'u32[]', space=smem, size = 0x4, offset = 0x4, fixed_abs, tag = 'smem constant byte address 0x4 - core index']
  #allocation1 [shape = 'u32[144,128]{1,0:T(1,128)}', space=vmem, size = 0x12000, scoped, tag = 'internal scratch']
  #allocation2 [shape = 'f32[16,1]{1,0:T(8,128)}', space=vmem, size = 0x2000, scoped, tag = 'scratch operand']
  %s0 = inlined_call_operand.vmem [shape: f32[64,32], index: 0, kind: input, shape index: {}]
  %s1 = inlined_call_operand.hbm [shape: f32[1,1], index: 1, kind: output, shape index: {}]
  %s2 = sld [smem:[#allocation0]]
  $region45: #{tpu_custom_call.1} parent=0
    _
  %s4 = ssub.s32 1, %s2
  %s5 = scalar_select 0, %s4, %s2
  $region1: #{tpu_custom_call.1} parent=0
    #allocation3 [shape = 'u8[512]{0}', space=vmem, size = 0x400, scoped, tag = 'output window, operand 0, single buffered']
    #allocation4 [shape = 's32[2]{0}', space=sflag, size = 0x8, scoped, tag = 'scoped memory for tpu_custom_call.1']
    %6 = vsyncpa [#allocation4], 0
    loop: start=0, step=1, limit=6
    $region2: #{tpu_custom_call.1} parent=1 // loop_pre_header
      _
    $region3: #{tpu_custom_call.1} parent=1 // loop_header
      %s8 = sphi 0, %s12
      %p9 = scmp.ge.s32.totalorder %s8, 6
      %s18 = sphi 0, %s20
      %s21 = sphi 0, %s18
      %s22 = sphi 0, %s21
      %s38 = sphi 0, %s22
      %s42 = sphi 0, %s42
      %s44 = sphi 0, %s42
      %s45 = sphi 0, %s44
      %s59 = sphi 0, %s45
    $region4: #{tpu_custom_call.1} parent=1 // loop_header_branch
      %11 = sbr.rel (%p9) target = $region8
    $region5: #{tpu_custom_call.1} parent=1 // loop_body
      %s13 = ssub.s32 %s8, 1
      %s14 = ssub.s32 %s8, 2
      %s15 = sadd.s32 %s8, 1
      %s16 = ssub.s32 %s8, %s15
      %p17 = scmp.eq.s32.totalorder %s16, 0
      %s19 = sadd.s32 %s18, 1
      %s20 = scalar_select %p17, %s18, %s19
      %p23 = pneg %p17
      %p24 = scmp.eq.s32.totalorder %s8, 3
      %p25 = por %p23, %p24
      %p26 = scmp.ne.s32.totalorder %s18, %s21
      %p27 = scmp.eq.s32.totalorder %s8, 0
      %p28 = por %p26, %p27
      %p29 = scmp.ne.s32.totalorder %s18, %s21
      %p30 = scmp.eq.s32.totalorder %s13, 3
      %p31 = por %p29, %p30
      %p32 = scmp.ne.s32.totalorder %s21, %s22
      %p33 = scmp.eq.s32.totalorder %s13, 0
      %p34 = por %p32, %p33
      %p35 = scmp.ne.s32.totalorder %s21, %s22
      %p36 = scmp.eq.s32.totalorder %s14, 3
      %p37 = por %p35, %p36
      %p39 = scmp.ne.s32.totalorder %s22, %s38
      %p40 = scmp.eq.s32.totalorder %s14, 0
      %p41 = por %p39, %p40
      %s43 = sadd.s32 %s42, 1
      %p46 = scmp.eq.s32.totalorder %s8, 3
      %p47 = scmp.ne.s32.totalorder %s42, %s44
      %p48 = scmp.eq.s32.totalorder %s8, 0
      %p49 = por %p47, %p48
      %p50 = scmp.ne.s32.totalorder %s42, %s44
      %p51 = scmp.eq.s32.totalorder %s13, 3
      %p52 = por %p50, %p51
      %p53 = scmp.ne.s32.totalorder %s44, %s45
      %p54 = scmp.eq.s32.totalorder %s13, 0
      %p55 = por %p53, %p54
      %p56 = scmp.ne.s32.totalorder %s44, %s45
      %p57 = scmp.eq.s32.totalorder %s14, 3
      %p58 = por %p56, %p57
      %p60 = scmp.ne.s32.totalorder %s45, %s59
      %p61 = scmp.eq.s32.totalorder %s14, 0
      %p62 = por %p60, %p61
      %p63 = scmp.le.s32.totalorder 1, %s8
      %p64 = scmp.lt.s32.totalorder %s8, 5
      %p65 = pnand %p63, %p64
      %p66 = pneg %p65
      // Predicated region
      $region9: #{tpu_custom_call.1} parent=5 // pred_check
        _
      $region10: #{tpu_custom_call.1} parent=5 // pred_check_branch
        %68 = sbr.rel (%p65) target = $region12
      $region11: #{tpu_custom_call.1} parent=5 // pred_region
        %s69 = ssub.s32 %s8, 1
      $region12: #{tpu_custom_call.1} parent=5 // pred_fallthru
        _
      %p70 = scmp.lt.s32.totalorder %s8, 4
      // Predicated region
      $region13: #{tpu_custom_call.1} parent=5 // pred_check
        %p71 = pneg %p70
      $region14: #{tpu_custom_call.1} parent=5 // pred_check_branch
        %73 = sbr.rel (%p71) target = $region16
      $region15: #{tpu_custom_call.1} parent=5 // pred_region
        // Predicated region
        $region17: #{tpu_custom_call.1} parent=15 // pred_check
          %p74 = pneg %p28
        $region18: #{tpu_custom_call.1} parent=15 // pred_check_branch
          %76 = sbr.rel (%p74) target = $region20
        $region19: #{tpu_custom_call.1} parent=15 // pred_region
          %s77 = smul.u32 2, %s8
          %p78 = scmp.lt.s32.totalorder %s77, 7
          %s79 = scalar_select %p78, %s77, 7
          %s80 = smul.addr %s79, 8
          %s81 = scalar_lea.vmem %s0, %s80
          %s82 = smul.u32 2, %s8
        $region20: #{tpu_custom_call.1} parent=15 // pred_fallthru
          _
      $region16: #{tpu_custom_call.1} parent=5 // pred_fallthru
        _
      %p83 = scmp.le.s32.totalorder 1, %s8
      %p84 = scmp.lt.s32.totalorder %s8, 5
      %p85 = pnand %p83, %p84
      %p86 = pneg %p85
      // Predicated region
      $region21: #{tpu_custom_call.1} parent=5 // pred_check
        _
      $region22: #{tpu_custom_call.1} parent=5 // pred_check_branch
        %88 = sbr.rel (%p85) target = $region24
      $region23: #{tpu_custom_call.1} parent=5 // pred_region
        %s89 = ssub.s32 %s8, 1
        %s90 = smul.u32 2, %s13
        %p91 = scmp.lt.s32.totalorder %s90, 7
        %s92 = scalar_select %p91, %s90, 7
        %s93 = smul.addr %s92, 8
        %s94 = scalar_lea.vmem %s0, %s93
        %p95 = pneg %p34
        %p96 = pneg %p31
        %p97 = pneg %p55
        %p98 = pneg %p52
        %s99 = smul.u32 2, %s13
        %p100 = scmp.lt.s32.totalorder %s99, 7
        %s101 = scalar_select %p100, %s99, 7
        %s102 = smul.addr %s101, 8
        %s103 = scalar_lea.vmem %s0, %s102
        %s104 = smul.u32 2, %s13
        %p105 = scmp.eq.s32.totalorder %s13, 0
        // Predicated region
        $region25: #{tpu_custom_call.1} parent=23 // pred_check
          %p106 = pneg %p105
        $region26: #{tpu_custom_call.1} parent=23 // pred_check_branch
          %108 = sbr.rel (%p106) target = $region28
        $region27: #{tpu_custom_call.1} parent=23 // pred_region
          %vm109 = vcmask 7168
          %110 = vst.msk [vmem:[#allocation2] sm:$0xff] %vm109, 0.0
          %111 = vst.msk [vmem:[#allocation2 + $0x8] sm:$0xff] %vm109, 0.0
        $region28: #{tpu_custom_call.1} parent=23 // pred_fallthru
          _
        %v112 = vld [vmem:[%s103] sm:$0xff]
        %v113 = vld [vmem:[%s103 + $0x8] sm:$0xff]
        %vm114 = vcmask 261120
        %v115 = vsel %vm114, %v112, -inf
        %116 = vmax.xlane.f32.xlu0 %v115
        %v117 = vpop.xlane.xlu0 %116
        %v118 = vsel %vm114, %v113, -inf
        %119 = vmax.xlane.f32.xlu0 %v118
        %v120 = vpop.xlane.xlu0 %119
        %v121 = vsub.f32 %v112, %v117
        %v122 = vsub.f32 %v113, %v120
        %v123 = vmul.f32 %v121, 1.442695
        %v124 = vpow.pop %v123
        %v125 = vmul.f32 %v122, 1.442695
        %v126 = vpow.pop %v125
        %v127 = vsel %vm114, %v124, 0.0
        %128 = vadd.xlane.f32.xlu0 %v127
        %v129 = vpop.xlane.xlu0 %128
        %v130 = vsel %vm114, %v126, 0.0
        %131 = vadd.xlane.f32.xlu0 %v130
        %v132 = vpop.xlane.xlu0 %131
        %v133 = vlog2.pop %v129
        %v134 = vmul.f32 %v133, 0.6931472
        %v135 = vlog2.pop %v132
        %v136 = vmul.f32 %v135, 0.6931472
        %v137 = vadd.f32 %v134, %v117
        %v138 = vadd.f32 %v136, %v120
        %v139 = vsel %vm114, %v112, 0.0
        %140 = vadd.xlane.f32.xlu0 %v139
        %v141 = vpop.xlane.xlu0 %140
        %v142 = vsel %vm114, %v113, 0.0
        %143 = vadd.xlane.f32.xlu0 %v142
        %v144 = vpop.xlane.xlu0 %143
        %v145 = vmul.f32 %v137, 32.0
        %v146 = vmul.f32 %v138, 32.0
        %v147 = vsub.f32 %v141, %v145
        %v148 = vsub.f32 %v144, %v146
        %v149 = vld [vmem:[#allocation2] sm:$0xff]
        %v150 = vld [vmem:[#allocation2 + $0x8] sm:$0xff]
        %v151 = vadd.f32 %v149, %v147
        %v152 = vadd.f32 %v150, %v148
        %vm153 = vcmask 7168
        %154 = vst.msk [vmem:[#allocation2] sm:$0xff] %vm153, %v151
        %155 = vst.msk [vmem:[#allocation2 + $0x8] sm:$0xff] %vm153, %v152
        %p156 = scmp.eq.s32.totalorder %s13, 3
        // Predicated region
        $region29: #{tpu_custom_call.1} parent=23 // pred_check
          %p157 = pneg %p156
        $region30: #{tpu_custom_call.1} parent=23 // pred_check_branch
          %159 = sbr.rel (%p157) target = $region32
        $region31: #{tpu_custom_call.1} parent=23 // pred_region
          %v160 = vld [vmem:[#allocation2] sm:$0xff]
          %v161 = vld [vmem:[#allocation2 + $0x8] sm:$0xff]
          %v162 = vsel %vm153, %v160, 0.0
          %v163 = vsel %vm153, %v161, 0.0
          %v164 = vadd.f32 %v162, %v163
          %165 = vadd.xlane.f32.xlu0 %v164
          %v166 = vpop.xlane.xlu0 %165
          %v167 = vrot.slane %v166, 4
          %v168 = vadd.f32 %v166, %v167
          %v169 = vrot.slane %v168, 2
          %v170 = vadd.f32 %v168, %v169
          %v171 = vrot.slane %v170, 1
          %v172 = vadd.f32 %v170, %v171
          %s173 = vtos %v172
          %v174 = vstv %s173
          %v175 = vmul.f32 %v174, -5.0403225e-05
          %vm176 = vcmask 0
          %177 = vst.msk [vmem:[#allocation3] sm:$0x1] %vm176, %v175
        $region32: #{tpu_custom_call.1} parent=23 // pred_fallthru
          _
        // Predicated region
        $region33: #{tpu_custom_call.1} parent=23 // pred_check
          %p178 = pneg %p52
        $region34: #{tpu_custom_call.1} parent=23 // pred_check_branch
          %180 = sbr.rel (%p178) target = $region36
        $region35: #{tpu_custom_call.1} parent=23 // pred_region
          %s182 = ssub.s32 16, 16
          %183 = vsyncadd [#allocation4], %s182
          %s185 = sshll.u32 [#allocation3], 4
          %s186 = int_to_ptr.vmem [resolvable:$true] %s185
          %188 = dma.vmem_to_hbm [thread:$0]  %s186, 16, %s1, [#allocation4]
        $region36: #{tpu_custom_call.1} parent=23 // pred_fallthru
          _
        // Predicated region
        $region37: #{tpu_custom_call.1} parent=23 // pred_check
          %p189 = pneg %p52
        $region38: #{tpu_custom_call.1} parent=23 // pred_check_branch
          %191 = sbr.rel (%p189) target = $region40
        $region39: #{tpu_custom_call.1} parent=23 // pred_region
          %192 = dma.done [#allocation4], 16
        $region40: #{tpu_custom_call.1} parent=23 // pred_fallthru
          _
      $region24: #{tpu_custom_call.1} parent=5 // pred_fallthru
        _
      %p193 = scmp.le.s32.totalorder 2, %s8
      // Predicated region
      $region41: #{tpu_custom_call.1} parent=5 // pred_check
        %p194 = pneg %p193
      $region42: #{tpu_custom_call.1} parent=5 // pred_check_branch
        %196 = sbr.rel (%p194) target = $region44
      $region43: #{tpu_custom_call.1} parent=5 // pred_region
        %s197 = ssub.s32 %s8, 2
      $region44: #{tpu_custom_call.1} parent=5 // pred_fallthru
        _
    $region6: #{tpu_custom_call.1} parent=1 // loop_footer
      %s12 = sadd.s32 1, %s8
    $region7: #{tpu_custom_call.1} parent=1 // loop_footer_branch
      %7 = sbr.rel target = $region3
    $region8: #{tpu_custom_call.1} parent=1 // loop_exit
      _
    %198 = vsyncpa [#allocation4], 1
    %s199 = scalar_lea.sflag [#allocation4], 1
    %200 = vsyncpa %s199, 1

</llo_original>
